<compile_context>
chip_gen: v7x
topology: tpu7x:2x2x1
jax: 0.10.0
libtpu: 0.0.40
codegen_flags: <defaults>
</compile_context>

<pallas_src>
import functools

import numpy as np
import jax
import jax.numpy as jnp
from jax.experimental import pallas as pl
from jax.experimental.pallas import tpu as pltpu


# ----------------------------------------------------------------------------
# Pallas kernel: out = (tanh(x) if use_activation else x) @ W + b
# ----------------------------------------------------------------------------
def fc_kernel(x_ref, w_ref, b_ref, o_ref, acc_ref, xcache_ref, *, use_activation):
    """One (tm, tn) output tile, accumulated over the K grid axis.

    x_ref:      (tm, tk)        f32 input tile (pre-activation)
    w_ref:      (tk, tn)        bf16 weight tile (stored (Din, Dout) == W.T)
    b_ref:      (1,  tn)        f32 bias tile
    o_ref:      (tm, tn)        f32 output tile
    acc_ref:    (tm, tn)        f32 accumulator scratch (persists across K steps)
    xcache_ref: (K/tk, tm, tk)  bf16 cache of tanh(x) for the current (tm, K) stripe
    """
    j = pl.program_id(1)
    k = pl.program_id(2)

    @pl.when(k == 0)
    def _init():
        # Fold the bias into the accumulator init (removes the epilogue add).
        acc_ref[...] = jnp.broadcast_to(b_ref[...], acc_ref.shape)

    @pl.when(j == 0)
    def _fill_cache():
        xv = x_ref[...]                    # f32
        if use_activation:                 # static (trace-time) flag
            xv = jnp.tanh(xv)              # f32 tanh on the EUP (works on v5e too)
        xcache_ref[k] = xv.astype(jnp.bfloat16)   # bf16 only for the MXU feed

    lhs = xcache_ref[k]                    # (tm, tk) bf16, no re-tanh for j > 0
    acc_ref[...] += jnp.dot(lhs, w_ref[...], preferred_element_type=jnp.float32)

    @pl.when(k == pl.num_programs(2) - 1)
    def _store():
        o_ref[...] = acc_ref[...].astype(o_ref.dtype)


# ----------------------------------------------------------------------------
# Wrapper
# ----------------------------------------------------------------------------
def _round_up(v, m):
    return (v + m - 1) // m * m


def fc_layer_forward(x, w, b, *, use_activation=True, dr_rate=0.0,
                     tm_pref=256, tn_pref=512, tk_pref=512):
    """x: (M, Din) f32;  w: (Din, Dout) (= torch weight transposed);  b: (1, Dout)."""
    del dr_rate  # dropout == identity at inference / dr_rate = 0.0
    M, K = x.shape
    Kw, N = w.shape
    assert K == Kw and b.shape == (1, N)

    # Tile sizes: sublane granule 16 (safe for the bf16 cache), lane granule 128.
    tm = min(tm_pref, _round_up(M, 16))
    tk = min(tk_pref, _round_up(K, 128))
    tn = min(tn_pref, _round_up(N, 128))
    Mp, Kp, Np = _round_up(M, tm), _round_up(K, tk), _round_up(N, tn)

    # Zero-padding is exact: tanh(0)=0 and zero rows/cols contribute nothing;
    # padded output rows/cols are sliced off below.
    xp = x if (Mp, Kp) == (M, K) else jnp.pad(x, ((0, Mp - M), (0, Kp - K)))
    wb = w.astype(jnp.bfloat16)
    if (Kp, Np) != (K, N):
        wb = jnp.pad(wb, ((0, Kp - K), (0, Np - N)))
    bf = b.astype(jnp.float32)
    if Np != N:
        bf = jnp.pad(bf, ((0, 0), (0, Np - N)))

    grid = (Mp // tm, Np // tn, Kp // tk)
    nk = Kp // tk

    # VMEM working set: double-buffered inputs/outputs + acc + tanh cache.
    vmem_need = (2 * tm * tk * 4 + 2 * tk * tn * 2 + 2 * tn * 4
                 + 2 * tm * tn * 4 + tm * tn * 4 + nk * tm * tk * 2)
    vmem_limit = int(min(max(2 * vmem_need, 32 << 20), 64 << 20))

    kernel = functools.partial(fc_kernel, use_activation=use_activation)

    out_padded = pl.pallas_call(
        kernel,
        out_shape=jax.ShapeDtypeStruct((Mp, Np), x.dtype),
        grid_spec=pltpu.PrefetchScalarGridSpec(
            num_scalar_prefetch=0,
            grid=grid,
            in_specs=[
                pl.BlockSpec((tm, tk), lambda i, j, k: (i, k)),   # x  (f32)
                pl.BlockSpec((tk, tn), lambda i, j, k: (k, j)),   # W  (bf16)
                pl.BlockSpec((1, tn), lambda i, j, k: (0, j)),    # b  (f32)
            ],
            out_specs=pl.BlockSpec((tm, tn), lambda i, j, k: (i, j)),
            scratch_shapes=[
                pltpu.VMEM((tm, tn), jnp.float32),                # f32 accumulator
                pltpu.VMEM((nk, tm, tk), jnp.bfloat16),           # tanh(x) stripe cache
            ],
        ),
        compiler_params=pltpu.CompilerParams(
            # j must be "arbitrary": the tanh cache is filled at j == 0 of each i.
            dimension_semantics=("parallel", "arbitrary", "arbitrary"),
            vmem_limit_bytes=vmem_limit),
        cost_estimate=pl.CostEstimate(
            flops=2 * M * N * K,
            transcendentals=(M * K if use_activation else 0),
            bytes_accessed=M * K * 4 + K * N * 2 + N * 4 + M * N * 4),
    )(xp, wb, bf)

    if (Mp, Np) != (M, N):
        out_padded = out_padded[:M, :N]
    return out_padded


# ----------------------------------------------------------------------------
# Pure-JAX reference (bf16-matched: f32 tanh, bf16 operands, f32 accumulate)
# ----------------------------------------------------------------------------
def reference_forward(x, w, b, *, use_activation=True):
    if use_activation:
        x = jnp.tanh(x)
    return jnp.dot(x.astype(jnp.bfloat16), w.astype(jnp.bfloat16),
                   preferred_element_type=jnp.float32) + b


# ----------------------------------------------------------------------------
# Deterministic parameter init (xavier_uniform weight, PyTorch-default bias)
# ----------------------------------------------------------------------------
def init_params(key, d_in, d_out):
    kw, kb = jax.random.split(key)
    bound_w = np.sqrt(6.0 / (d_in + d_out))          # xavier_uniform_
    bound_b = 1.0 / np.sqrt(d_in)                    # nn.Linear default bias init
    w = jax.random.uniform(kw, (d_in, d_out), jnp.float32, -bound_w, bound_w)
    b = jax.random.uniform(kb, (1, d_out), jnp.float32, -bound_b, bound_b)
    return w, b


# ----------------------------------------------------------------------------
if __name__ == "__main__":
    # Small shapes consistent with the module: batch=16, input_dim=256, output_dim=128
    B, D_IN, D_OUT = 16, 256, 128

    key = jax.random.PRNGKey(0)
    k_x, k_p = jax.random.split(key)

    x = jax.random.normal(k_x, (B, D_IN), jnp.float32)
    w, b = init_params(k_p, D_IN, D_OUT)

    out = fc_layer_forward(x, w, b, use_activation=True, dr_rate=0.0)
    out = jax.block_until_ready(out)

    ref = jax.block_until_ready(reference_forward(x, w, b, use_activation=True))
    np.testing.assert_allclose(np.asarray(out), np.asarray(ref), rtol=2e-2, atol=2e-2)
    assert out.shape == (B, D_OUT) and out.dtype == jnp.float32

    print("KERNEL_OK")
</pallas_src>

<mosaic_0001>
module attributes {stable_mosaic.version = 11 : i64} {
  func.func @fc_kernel(%arg0: i32, %arg1: i32, %arg2: i32, %arg3: memref<16x256xf32, #tpu.memory_space<vmem>>, %arg4: memref<256x128xbf16, #tpu.memory_space<vmem>>, %arg5: memref<1x128xf32, #tpu.memory_space<vmem>>, %arg6: memref<16x128xf32, #tpu.memory_space<vmem>>, %arg7: memref<16x128xf32, #tpu.memory_space<vmem>>, %arg8: memref<1x16x256xbf16, #tpu.memory_space<vmem>>) attributes {dimension_semantics = [#tpu.dimension_semantics<parallel>, #tpu.dimension_semantics<arbitrary>, #tpu.dimension_semantics<arbitrary>], iteration_bounds = array<i64: 1, 1, 1>, scalar_prefetch = 0 : i64, scratch_operands = 2 : i64, tpu.core_type = #tpu.core_type<tc>, window_params = [{transform_indices = @transform_0, window_bounds = array<i64: 16, 256>}, {transform_indices = @transform_1, window_bounds = array<i64: 256, 128>}, {transform_indices = @transform_2, window_bounds = array<i64: 1, 128>}, {transform_indices = @transform_3, window_bounds = array<i64: 16, 128>}]} {
    %c0_i32 = arith.constant 0 : i32
    %0 = arith.cmpi eq, %arg2, %c0_i32 : i32
    %1 = arith.extui %0 : i1 to i32
    %c0_i32_0 = arith.constant 0 : i32
    %2 = arith.cmpi ne, %1, %c0_i32_0 : i32
    scf.if %2 {
      %c0_12 = arith.constant 0 : index
      %c0_13 = arith.constant 0 : index
      %17 = vector.load %arg5[%c0_12, %c0_13] : memref<1x128xf32, #tpu.memory_space<vmem>>, vector<1x128xf32>
      %18 = vector.shape_cast %17 : vector<1x128xf32> to vector<1x128xf32>
      %19 = vector.broadcast %18 : vector<1x128xf32> to vector<16x128xf32>
      %c0_14 = arith.constant 0 : index
      %c0_15 = arith.constant 0 : index
      %20 = vector.load %arg7[%c0_14, %c0_15] : memref<16x128xf32, #tpu.memory_space<vmem>>, vector<16x128xf32>
      tpu.vector_store %arg7[%c0_14, %c0_15], %19 {strides = array<i32>} : memref<16x128xf32, #tpu.memory_space<vmem>>, vector<16x128xf32>,
    } else {
    }
    %c0_i32_1 = arith.constant 0 : i32
    %3 = arith.cmpi eq, %arg1, %c0_i32_1 : i32
    %4 = arith.extui %3 : i1 to i32
    %c0_i32_2 = arith.constant 0 : i32
    %5 = arith.cmpi ne, %4, %c0_i32_2 : i32
    scf.if %5 {
      %c0_12 = arith.constant 0 : index
      %c0_13 = arith.constant 0 : index
      %17 = vector.load %arg3[%c0_12, %c0_13] : memref<16x256xf32, #tpu.memory_space<vmem>>, vector<16x256xf32>
      %18 = math.tanh %17 : vector<16x256xf32>
      %19 = arith.truncf %18 : vector<16x256xf32> to vector<16x256xbf16>
      %20 = arith.index_cast %arg2 : i32 to index
      %c0_14 = arith.constant 0 : index
      %c0_15 = arith.constant 0 : index
      %21 = vector.load %arg8[%20, %c0_14, %c0_15] : memref<1x16x256xbf16, #tpu.memory_space<vmem>>, vector<1x16x256xbf16>
      %22 = vector.shape_cast %21 : vector<1x16x256xbf16> to vector<16x256xbf16>
      %23 = vector.shape_cast %19 : vector<16x256xbf16> to vector<1x16x256xbf16>
      tpu.vector_store %arg8[%20, %c0_14, %c0_15], %23 {strides = array<i32>} : memref<1x16x256xbf16, #tpu.memory_space<vmem>>, vector<1x16x256xbf16>,
    } else {
    }
    %6 = arith.index_cast %arg2 : i32 to index
    %c0 = arith.constant 0 : index
    %c0_3 = arith.constant 0 : index
    %7 = vector.load %arg8[%6, %c0, %c0_3] : memref<1x16x256xbf16, #tpu.memory_space<vmem>>, vector<1x16x256xbf16>
    %8 = vector.shape_cast %7 : vector<1x16x256xbf16> to vector<16x256xbf16>
    %c0_4 = arith.constant 0 : index
    %c0_5 = arith.constant 0 : index
    %9 = vector.load %arg7[%c0_4, %c0_5] : memref<16x128xf32, #tpu.memory_space<vmem>>, vector<16x128xf32>
    %c0_6 = arith.constant 0 : index
    %c0_7 = arith.constant 0 : index
    %10 = vector.load %arg4[%c0_6, %c0_7] : memref<256x128xbf16, #tpu.memory_space<vmem>>, vector<256x128xbf16>
    %cst = arith.constant dense<0.000000e+00> : vector<16x128xf32>
    %11 = tpu.matmul %8, %10, %cst {dimension_numbers = #tpu.dot_dimension_numbers<[1], [0], [0], [1], [0, 0, 1, 1], [], []>} : vector<16x256xbf16>, vector<256x128xbf16>, vector<16x128xf32> -> vector<16x128xf32>
    %12 = arith.addf %9, %11 : vector<16x128xf32>
    %c0_8 = arith.constant 0 : index
    %c0_9 = arith.constant 0 : index
    %13 = vector.load %arg7[%c0_8, %c0_9] : memref<16x128xf32, #tpu.memory_space<vmem>>, vector<16x128xf32>
    tpu.vector_store %arg7[%c0_8, %c0_9], %12 {strides = array<i32>} : memref<16x128xf32, #tpu.memory_space<vmem>>, vector<16x128xf32>,
    %c0_i32_10 = arith.constant 0 : i32
    %14 = arith.cmpi eq, %arg2, %c0_i32_10 : i32
    %15 = arith.extui %14 : i1 to i32
    %c0_i32_11 = arith.constant 0 : i32
    %16 = arith.cmpi ne, %15, %c0_i32_11 : i32
    scf.if %16 {
      %c0_12 = arith.constant 0 : index
      %c0_13 = arith.constant 0 : index
      %17 = vector.load %arg7[%c0_12, %c0_13] : memref<16x128xf32, #tpu.memory_space<vmem>>, vector<16x128xf32>
      %c0_14 = arith.constant 0 : index
      %c0_15 = arith.constant 0 : index
      %18 = vector.load %arg6[%c0_14, %c0_15] : memref<16x128xf32, #tpu.memory_space<vmem>>, vector<16x128xf32>
      tpu.vector_store %arg6[%c0_14, %c0_15], %17 {strides = array<i32>} : memref<16x128xf32, #tpu.memory_space<vmem>>, vector<16x128xf32>,
    } else {
    }
    return
  }
  func.func @transform_0(%arg0: i32, %arg1: i32, %arg2: i32) -> (i32, i32) {
    %c0_i32 = arith.constant 0 : i32
    return %arg0, %arg2 : i32, i32
  }
  func.func @transform_1(%arg0: i32, %arg1: i32, %arg2: i32) -> (i32, i32) {
    %c0_i32 = arith.constant 0 : i32
    return %arg2, %arg1 : i32, i32
  }
  func.func @transform_2(%arg0: i32, %arg1: i32, %arg2: i32) -> (i32, i32) {
    %c0_i32 = arith.constant 0 : i32
    %c0_i32_0 = arith.constant 0 : i32
    return %c0_i32, %arg1 : i32, i32
  }
  func.func @transform_3(%arg0: i32, %arg1: i32, %arg2: i32) -> (i32, i32) {
    %c0_i32 = arith.constant 0 : i32
    return %arg0, %arg1 : i32, i32
  }
}

</mosaic_0001>

<llo_original>
// kernel: tpu_custom_call.1
$region0: #{tpu_custom_call.1}
  #allocation0 [shape = 'u32[]', space=smem, size = 0x4, offset = 0x4, fixed_abs, tag = 'smem constant byte address 0x4 - core index']
  #allocation1 [shape = 'u32[144,128]{1,0:T(1,128)}', space=vmem, size = 0x12000, scoped, tag = 'internal scratch']
  #allocation2 [shape = 'f32[16,128]{1,0:T(8,128)}', space=vmem, size = 0x2000, scoped, tag = 'scratch operand']
  #allocation3 [shape = 'bf16[1,16,256]{2,1,0:T(16,128)(2,1)}', space=vmem, size = 0x2000, scoped, tag = 'scratch operand']
  %s0 = inlined_call_operand.hbm [shape: f32[16,256], index: 0, kind: input, shape index: {}]
  %s1 = inlined_call_operand.hbm [shape: bf16[256,128], index: 1, kind: input, shape index: {}]
  %s2 = inlined_call_operand.vmem [shape: f32[1,128], index: 2, kind: input, shape index: {}]
  %s3 = inlined_call_operand.hbm [shape: f32[16,128], index: 3, kind: output, shape index: {}]
  %s4 = sld [smem:[#allocation0]]
  $region42: #{tpu_custom_call.1} parent=0
    _
  %s6 = ssub.s32 1, %s4
  %s7 = scalar_select 0, %s6, %s4
  $region1: #{tpu_custom_call.1} parent=0
    #allocation4 [shape = 'u8[16384]{0}', space=vmem, size = 0x4000, scoped, tag = 'input window, operand 0, single buffered']
    #allocation5 [shape = 's32[1]{0}', space=sflag, size = 0x4, scoped, tag = 'scoped memory for tpu_custom_call.1']
    #allocation6 [shape = 's32[1]{0}', space=sflag, size = 0x4, scoped, tag = 'scoped memory for tpu_custom_call.1']
    #allocation7 [shape = 'u8[65536]{0}', space=vmem, size = 0x10000, scoped, tag = 'input window, operand 1, single buffered']
    #allocation8 [shape = 's32[1]{0}', space=sflag, size = 0x4, scoped, tag = 'scoped memory for tpu_custom_call.1']
    #allocation9 [shape = 'u8[8192]{0}', space=vmem, size = 0x2000, scoped, tag = 'output window, operand 0, single buffered']
    %8 = vsyncpa [#allocation5], 0
    %9 = vsyncpa [#allocation8], 0
    %10 = vsyncpa [#allocation6], 0
    // Predicated region
    $region2: #{tpu_custom_call.1} parent=1 // pred_check
      _
    $region3: #{tpu_custom_call.1} parent=1 // pred_check_branch
      %12 = sbr.rel (0) target = $region5
    $region4: #{tpu_custom_call.1} parent=1 // pred_region
      %s14 = ssub.s32 512, 512
      %15 = vsyncadd [#allocation5], %s14
      %s16 = sshll.u32 [#allocation4], 4
      %s17 = int_to_ptr.vmem [resolvable:$true] %s16
      %22 = dma.hbm_to_vmem [thread:$0]  %s0, 512, %s17, [#allocation5], 256, 256, 16
    $region5: #{tpu_custom_call.1} parent=1 // pred_fallthru
      _
    // Predicated region
    $region6: #{tpu_custom_call.1} parent=1 // pred_check
      _
    $region7: #{tpu_custom_call.1} parent=1 // pred_check_branch
      %24 = sbr.rel (0) target = $region9
    $region8: #{tpu_custom_call.1} parent=1 // pred_region
      %s26 = ssub.s32 2048, 2048
      %27 = vsyncadd [#allocation8], %s26
      %s28 = sshll.u32 [#allocation7], 4
      %s29 = int_to_ptr.vmem [resolvable:$true] %s28
      %34 = dma.hbm_to_vmem [thread:$0]  %s1, 2048, %s29, [#allocation8], 64, 64, 4
    $region9: #{tpu_custom_call.1} parent=1 // pred_fallthru
      _
    // Predicated region
    $region10: #{tpu_custom_call.1} parent=1 // pred_check
      _
    $region11: #{tpu_custom_call.1} parent=1 // pred_check_branch
      %36 = sbr.rel (0) target = $region13
    $region12: #{tpu_custom_call.1} parent=1 // pred_region
      _
    $region13: #{tpu_custom_call.1} parent=1 // pred_fallthru
      _
    // Predicated region
    $region14: #{tpu_custom_call.1} parent=1 // pred_check
      _
    $region15: #{tpu_custom_call.1} parent=1 // pred_check_branch
      %38 = sbr.rel (0) target = $region17
    $region16: #{tpu_custom_call.1} parent=1 // pred_region
      %39 = dma.done [#allocation5], 512
    $region17: #{tpu_custom_call.1} parent=1 // pred_fallthru
      _
    // Predicated region
    $region18: #{tpu_custom_call.1} parent=1 // pred_check
      _
    $region19: #{tpu_custom_call.1} parent=1 // pred_check_branch
      %41 = sbr.rel (0) target = $region21
    $region20: #{tpu_custom_call.1} parent=1 // pred_region
      %42 = dma.done [#allocation8], 2048
    $region21: #{tpu_custom_call.1} parent=1 // pred_fallthru
      _
    %p44 = scmp.eq.s32.totalorder 0, 0
    // Predicated region
    $region22: #{tpu_custom_call.1} parent=1 // pred_check
      %p45 = pneg %p44
    $region23: #{tpu_custom_call.1} parent=1 // pred_check_branch
      %47 = sbr.rel (%p45) target = $region25
    $region24: #{tpu_custom_call.1} parent=1 // pred_region
      %v48 = vld [vmem:[%s2] sm:$0x1]
      %v50 = vlaneseq
      %v51 = vshrl.u32 %v50, 7
      %v52 = vsub.s32 0, %v51
      %v53 = vrot.slane %v48, %v52
      %55 = vst [vmem:[#allocation2] sm:$0xff] %v53
      %56 = vst [vmem:[#allocation2 + $0x8] sm:$0xff] %v53
    $region25: #{tpu_custom_call.1} parent=1 // pred_fallthru
      _
    %p57 = scmp.eq.s32.totalorder 0, 0
    // Predicated region
    $region26: #{tpu_custom_call.1} parent=1 // pred_check
      %p58 = pneg %p57
    $region27: #{tpu_custom_call.1} parent=1 // pred_check_branch
      %60 = sbr.rel (%p58) target = $region29
    $region28: #{tpu_custom_call.1} parent=1 // pred_region
      %v61 = vld [vmem:[#allocation4] sm:$0xff]
      %v62 = vld [vmem:[#allocation4 + $0x8] sm:$0xff]
      %v63 = vld [vmem:[#allocation4 + $0x10] sm:$0xff]
      %v64 = vld [vmem:[#allocation4 + $0x18] sm:$0xff]
      %v65 = vtanh.pop %v61
      %v66 = vtanh.pop %v62
      %v67 = vtanh.pop %v63
      %v68 = vtanh.pop %v64
      %v69 = vpack.c.bf16 %v67, %v65
      %v70 = vpack.c.bf16 %v68, %v66
      %s71 = smul.u32 0, 2
      %s72 = smul.addr %s71, 8
      %s73 = scalar_lea.vmem [#allocation3], %s72
      %74 = vst [vmem:[%s73] sm:$0xff] %v69
      %75 = vst [vmem:[%s73 + $0x8] sm:$0xff] %v70
    $region29: #{tpu_custom_call.1} parent=1 // pred_fallthru
      _
    %s76 = smul.u32 0, 2
    %s77 = smul.addr %s76, 8
    %s78 = scalar_lea.vmem [#allocation3], %s77
    %v79 = vld [vmem:[%s78] sm:$0xff]
    %v80 = vld [vmem:[%s78 + $0x8] sm:$0xff]
    %v81 = vld [vmem:[#allocation2] sm:$0xff]
    %v82 = vld [vmem:[#allocation2 + $0x8] sm:$0xff]
    %v83 = vld [vmem:[#allocation7] sm:$0xf]
    %v84 = vld [vmem:[#allocation7 + $0x4] sm:$0xf]
    %v85 = vld [vmem:[#allocation7 + $0x8] sm:$0xf]
    %v86 = vld [vmem:[#allocation7 + $0xc] sm:$0xf]
    %v87 = vld [vmem:[#allocation7 + $0x10] sm:$0xf]
    %v88 = vld [vmem:[#allocation7 + $0x14] sm:$0xf]
    %v89 = vld [vmem:[#allocation7 + $0x18] sm:$0xf]
    %v90 = vld [vmem:[#allocation7 + $0x1c] sm:$0xf]
    %v91 = vld [vmem:[#allocation7 + $0x20] sm:$0xf]
    %v92 = vld [vmem:[#allocation7 + $0x24] sm:$0xf]
    %v93 = vld [vmem:[#allocation7 + $0x28] sm:$0xf]
    %v94 = vld [vmem:[#allocation7 + $0x2c] sm:$0xf]
    %v95 = vld [vmem:[#allocation7 + $0x30] sm:$0xf]
    %v96 = vld [vmem:[#allocation7 + $0x34] sm:$0xf]
    %v97 = vld [vmem:[#allocation7 + $0x38] sm:$0xf]
    %v98 = vld [vmem:[#allocation7 + $0x3c] sm:$0xf]
    %v99 = vld [vmem:[#allocation7 + $0x40] sm:$0xf]
    %v100 = vld [vmem:[#allocation7 + $0x44] sm:$0xf]
    %v101 = vld [vmem:[#allocation7 + $0x48] sm:$0xf]
    %v102 = vld [vmem:[#allocation7 + $0x4c] sm:$0xf]
    %v103 = vld [vmem:[#allocation7 + $0x50] sm:$0xf]
    %v104 = vld [vmem:[#allocation7 + $0x54] sm:$0xf]
    %v105 = vld [vmem:[#allocation7 + $0x58] sm:$0xf]
    %v106 = vld [vmem:[#allocation7 + $0x5c] sm:$0xf]
    %v107 = vld [vmem:[#allocation7 + $0x60] sm:$0xf]
    %v108 = vld [vmem:[#allocation7 + $0x64] sm:$0xf]
    %v109 = vld [vmem:[#allocation7 + $0x68] sm:$0xf]
    %v110 = vld [vmem:[#allocation7 + $0x6c] sm:$0xf]
    %v111 = vld [vmem:[#allocation7 + $0x70] sm:$0xf]
    %v112 = vld [vmem:[#allocation7 + $0x74] sm:$0xf]
    %v113 = vld [vmem:[#allocation7 + $0x78] sm:$0xf]
    %v114 = vld [vmem:[#allocation7 + $0x7c] sm:$0xf]
    %v147 = vunpack.c.l.b16 %v83
    %v148 = vunpack.c.l.b16 %v84
    %v149 = vunpack.c.l.b16 %v85
    %v150 = vunpack.c.l.b16 %v86
    %v151 = vunpack.c.l.b16 %v87
    %v152 = vunpack.c.l.b16 %v88
    %v153 = vunpack.c.l.b16 %v89
    %v154 = vunpack.c.l.b16 %v90
    %v155 = vunpack.c.l.b16 %v91
    %v156 = vunpack.c.l.b16 %v92
    %v157 = vunpack.c.l.b16 %v93
    %v158 = vunpack.c.l.b16 %v94
    %v159 = vunpack.c.l.b16 %v95
    %v160 = vunpack.c.l.b16 %v96
    %v161 = vunpack.c.l.b16 %v97
    %v162 = vunpack.c.l.b16 %v98
    %v163 = vunpack.c.l.b16 %v99
    %v164 = vunpack.c.l.b16 %v100
    %v165 = vunpack.c.l.b16 %v101
    %v166 = vunpack.c.l.b16 %v102
    %v167 = vunpack.c.l.b16 %v103
    %v168 = vunpack.c.l.b16 %v104
    %v169 = vunpack.c.l.b16 %v105
    %v170 = vunpack.c.l.b16 %v106
    %v171 = vunpack.c.l.b16 %v107
    %v172 = vunpack.c.l.b16 %v108
    %v173 = vunpack.c.l.b16 %v109
    %v174 = vunpack.c.l.b16 %v110
    %v175 = vunpack.c.l.b16 %v111
    %v176 = vunpack.c.l.b16 %v112
    %v177 = vunpack.c.l.b16 %v113
    %v178 = vunpack.c.l.b16 %v114
    %v179 = vpack.c.b16 %v148, %v147
    %v180 = vpack.c.b16 %v150, %v149
    %v181 = vpack.c.b16 %v152, %v151
    %v182 = vpack.c.b16 %v154, %v153
    %v183 = vpack.c.b16 %v156, %v155
    %v184 = vpack.c.b16 %v158, %v157
    %v185 = vpack.c.b16 %v160, %v159
    %v186 = vpack.c.b16 %v162, %v161
    %v187 = vpack.c.b16 %v164, %v163
    %v188 = vpack.c.b16 %v166, %v165
    %v189 = vpack.c.b16 %v168, %v167
    %v190 = vpack.c.b16 %v170, %v169
    %v191 = vpack.c.b16 %v172, %v171
    %v192 = vpack.c.b16 %v174, %v173
    %v193 = vpack.c.b16 %v176, %v175
    %v194 = vpack.c.b16 %v178, %v177
    %211 = vmatprep.subr.bf16.mxu0 0
    %212 = vmatpush1.bf16.msra.mxu0 %v179
    %213 = vmatprep.subr.bf16.mxu0 0
    %214 = vmatpush1.bf16.msra.mxu0 %v180
    %215 = vmatprep.subr.bf16.mxu0 0
    %216 = vmatpush1.bf16.msra.mxu0 %v181
    %217 = vmatprep.subr.bf16.mxu0 0
    %218 = vmatpush1.bf16.msra.mxu0 %v182
    %219 = vmatprep.subr.bf16.mxu0 0
    %220 = vmatpush1.bf16.msra.mxu0 %v183
    %221 = vmatprep.subr.bf16.mxu0 0
    %222 = vmatpush1.bf16.msra.mxu0 %v184
    %223 = vmatprep.subr.bf16.mxu0 0
    %224 = vmatpush1.bf16.msra.mxu0 %v185
    %225 = vmatprep.subr.bf16.mxu0 0
    %226 = vmatpush1.bf16.msra.mxu0 %v186
    %227 = vmatprep.subr.bf16.mxu0 0
    %228 = vmatpush1.bf16.msra.mxu0 %v187
    %229 = vmatprep.subr.bf16.mxu0 0
    %230 = vmatpush1.bf16.msra.mxu0 %v188
    %231 = vmatprep.subr.bf16.mxu0 0
    %232 = vmatpush1.bf16.msra.mxu0 %v189
    %233 = vmatprep.subr.bf16.mxu0 0
    %234 = vmatpush1.bf16.msra.mxu0 %v190
    %235 = vmatprep.subr.bf16.mxu0 0
    %236 = vmatpush1.bf16.msra.mxu0 %v191
    %237 = vmatprep.subr.bf16.mxu0 0
    %238 = vmatpush1.bf16.msra.mxu0 %v192
    %239 = vmatprep.subr.bf16.mxu0 0
    %240 = vmatpush1.bf16.msra.mxu0 %v193
    %241 = vmatprep.subr.bf16.mxu0 0
    %242 = vmatpush1.bf16.msra.mxu0 %v194
    %243 = vmatprep.mubr.bf16.mxu0 %v80
    %244 = vmatmul.mubr.bf16.gmra.mrb[0].mxu0 %v79
    %v245 = vpop.f32.mrb[0].mxu0
    %v246 = vadd.f32 0.0, %v245
    %v247 = vpop.f32.mrb[0].mxu0
    %v248 = vpop.f32.mrb[0].mxu0
    %v249 = vadd.f32 0.0, %v248
    %v250 = vpop.f32.mrb[0].mxu0
    %251 = vdwg.mxu0
    %v252 = vadd.f32 %v81, %v246
    %v253 = vadd.f32 %v82, %v249
    %254 = vst [vmem:[#allocation2] sm:$0xff] %v252
    %255 = vst [vmem:[#allocation2 + $0x8] sm:$0xff] %v253
    // Predicated region
    $region30: #{tpu_custom_call.1} parent=1 // pred_check
      %p256 = pneg %p44
    $region31: #{tpu_custom_call.1} parent=1 // pred_check_branch
      %258 = sbr.rel (%p256) target = $region33
    $region32: #{tpu_custom_call.1} parent=1 // pred_region
      %v259 = vld [vmem:[#allocation2] sm:$0xff]
      %v260 = vld [vmem:[#allocation2 + $0x8] sm:$0xff]
      %261 = vst [vmem:[#allocation9] sm:$0xff] %v259
      %262 = vst [vmem:[#allocation9 + $0x8] sm:$0xff] %v260
    $region33: #{tpu_custom_call.1} parent=1 // pred_fallthru
      _
    // Predicated region
    $region34: #{tpu_custom_call.1} parent=1 // pred_check
      _
    $region35: #{tpu_custom_call.1} parent=1 // pred_check_branch
      %264 = sbr.rel (0) target = $region37
    $region36: #{tpu_custom_call.1} parent=1 // pred_region
      %s266 = ssub.s32 256, 256
      %267 = vsyncadd [#allocation6], %s266
      %s268 = sshll.u32 [#allocation9], 4
      %s269 = int_to_ptr.vmem [resolvable:$true] %s268
      %274 = dma.vmem_to_hbm [thread:$0]  %s269, 256, %s3, [#allocation6], 128, 128, 8
    $region37: #{tpu_custom_call.1} parent=1 // pred_fallthru
      _
    // Predicated region
    $region38: #{tpu_custom_call.1} parent=1 // pred_check
      _
    $region39: #{tpu_custom_call.1} parent=1 // pred_check_branch
      %276 = sbr.rel (0) target = $region41
    $region40: #{tpu_custom_call.1} parent=1 // pred_region
      %277 = dma.done [#allocation6], 256
    $region41: #{tpu_custom_call.1} parent=1 // pred_fallthru
      _
    %278 = vsyncpa [#allocation5], 1
    %279 = vsyncpa [#allocation8], 1
    %280 = vsyncpa [#allocation6], 1

</llo_original>
